<compile_context>
chip_gen: v7x
topology: tpu7x:2x2x1
jax: 0.10.0
libtpu: 0.0.40
codegen_flags: <defaults>
</compile_context>

<pallas_src>
import functools
import math

import jax
import jax.numpy as jnp
from jax.experimental import pallas as pl
from jax.experimental.pallas import tpu as pltpu


# --------------------------------- kernels --------------------------------- #

def _ln_linear_kernel(x_ref, g_ref, b_ref, w_ref, bias_ref, o_ref, xn_ref,
                      *, eps, activation):
    """out = act(LayerNorm_f32(x) @ W_bf16 + bias); LN computed once per row tile."""
    # Column-tile index j = program_id(1) is the fastest grid axis; the LayerNorm
    # result for this row tile is cached in the bf16 VMEM scratch at j == 0 and
    # reused for all column tiles (saves VPU/EUP work in an MXU-bound kernel).
    @pl.when(pl.program_id(1) == 0)
    def _():
        x = x_ref[...].astype(jnp.float32)                       # (tm, K)
        mu = jnp.mean(x, axis=-1, keepdims=True)
        xc = x - mu
        var = jnp.mean(xc * xc, axis=-1, keepdims=True)
        xn = xc * jax.lax.rsqrt(var + eps)
        xn = xn * g_ref[...].astype(jnp.float32) + b_ref[...].astype(jnp.float32)
        xn_ref[...] = xn.astype(xn_ref.dtype)                    # bf16 for the MXU

    acc = jnp.dot(xn_ref[...], w_ref[...],                       # bf16 x bf16
                  preferred_element_type=jnp.float32)            # f32 accumulate
    acc = acc + bias_ref[...].astype(jnp.float32)
    if activation == "quick_gelu":
        acc = acc * jax.nn.sigmoid(1.702 * acc)
    o_ref[...] = acc.astype(o_ref.dtype)


def _linear_residual_kernel(x_ref, w_ref, bias_ref, res_ref, scale_ref, o_ref):
    """out = residual + drop_path_scale * (x @ W + bias); DropPath fused here."""
    acc = jnp.dot(x_ref[...].astype(jnp.bfloat16), w_ref[...],
                  preferred_element_type=jnp.float32)            # (tm, tn) f32
    acc = acc + bias_ref[...].astype(jnp.float32)
    acc = acc * scale_ref[...]                                   # (tm, 1) f32 broadcast
    o_ref[...] = (res_ref[...].astype(jnp.float32) + acc).astype(o_ref.dtype)


def _attention_kernel(qkv_ref, mask_ref, o_ref, *, n_head, d_model, sm_scale):
    """One batch: softmax(q k^T * scale + mask) v for all heads, f32 softmax."""
    D = d_model
    dh = D // n_head
    qkv = qkv_ref[...]                                           # (L, 3D) bf16
    mask = mask_ref[...].astype(jnp.float32)                     # (L, L)
    # Static per-head loop: only 2-D dots / static lane slices -> robust lowering.
    # (For production shapes one would group heads into >=128-lane blocks.)
    for h in range(n_head):
        qh = qkv[:, h * dh:(h + 1) * dh]                         # (L, dh) bf16
        kh = qkv[:, D + h * dh:D + (h + 1) * dh]
        vh = qkv[:, 2 * D + h * dh:2 * D + (h + 1) * dh]
        s = jax.lax.dot_general(qh, kh, (((1,), (1,)), ((), ())),
                                preferred_element_type=jnp.float32) * sm_scale
        s = s + mask                                             # additive mask
        m = jnp.max(s, axis=-1, keepdims=True)
        p = jnp.exp(s - m)
        denom = jnp.sum(p, axis=-1, keepdims=True)
        p = p * pl.reciprocal(denom, approx=True)                # EUP, ~free
        oh = jnp.dot(p.astype(vh.dtype), vh,
                     preferred_element_type=jnp.float32)
        o_ref[:, h * dh:(h + 1) * dh] = oh.astype(o_ref.dtype)


# -------------------------------- wrappers --------------------------------- #

_VMEM_LIMIT = 48 * 1024 * 1024     # fits v5e/v6e (128 MiB) and v7x (64 MiB) physical


def _row_tile(t):
    return t if t <= 256 else 256


def _col_tile(n):
    if n <= 512:
        return n                   # full width is always legal
    for cand in (512, 256, 128):
        if n % cand == 0:
            return cand
    return n                       # odd width: single full-width tile


def ln_linear(x, gamma, beta, w_t, bias, *, activation=None, eps=1e-5,
              out_dtype=jnp.bfloat16):
    """Fused LayerNorm + Linear (+ optional QuickGELU). x: (T, K) f32, w_t: (K, N) bf16."""
    T, K = x.shape
    _, Nout = w_t.shape
    tm, tn = _row_tile(T), _col_tile(Nout)
    grid = (pl.cdiv(T, tm), pl.cdiv(Nout, tn))
    kernel = functools.partial(_ln_linear_kernel, eps=eps, activation=activation)
    return pl.pallas_call(
        kernel,
        out_shape=jax.ShapeDtypeStruct((T, Nout), out_dtype),
        grid=grid,
        in_specs=[
            pl.BlockSpec((tm, K), lambda i, j: (i, 0)),    # x row tile (resident across j)
            pl.BlockSpec((1, K), lambda i, j: (0, 0)),     # gamma
            pl.BlockSpec((1, K), lambda i, j: (0, 0)),     # beta
            pl.BlockSpec((K, tn), lambda i, j: (0, j)),    # bf16 weight column tile
            pl.BlockSpec((1, tn), lambda i, j: (0, j)),    # bias
        ],
        out_specs=pl.BlockSpec((tm, tn), lambda i, j: (i, j)),
        scratch_shapes=[pltpu.VMEM((tm, K), jnp.bfloat16)],    # cached LayerNorm output
        compiler_params=pltpu.CompilerParams(
            dimension_semantics=("parallel", "arbitrary"),     # scratch carried over j
            vmem_limit_bytes=_VMEM_LIMIT),
    )(x, gamma.reshape(1, K), beta.reshape(1, K), w_t, bias.reshape(1, Nout))


def linear_residual(x, w_t, bias, residual, scale):
    """Fused Linear + DropPath scale + residual add. x: (T, K) bf16, residual: (T, N) f32."""
    T, K = x.shape
    _, Nout = w_t.shape
    tm, tn = _row_tile(T), _col_tile(Nout)
    grid = (pl.cdiv(T, tm), pl.cdiv(Nout, tn))
    return pl.pallas_call(
        _linear_residual_kernel,
        out_shape=jax.ShapeDtypeStruct((T, Nout), residual.dtype),
        grid=grid,
        in_specs=[
            pl.BlockSpec((tm, K), lambda i, j: (i, 0)),
            pl.BlockSpec((K, tn), lambda i, j: (0, j)),
            pl.BlockSpec((1, tn), lambda i, j: (0, j)),
            pl.BlockSpec((tm, tn), lambda i, j: (i, j)),
            pl.BlockSpec((tm, 1), lambda i, j: (i, 0)),
        ],
        out_specs=pl.BlockSpec((tm, tn), lambda i, j: (i, j)),
        compiler_params=pltpu.CompilerParams(
            dimension_semantics=("parallel", "parallel"),
            vmem_limit_bytes=_VMEM_LIMIT),
    )(x, w_t, bias.reshape(1, Nout), residual, scale)


def attention(qkv, mask, *, n_head, seq_len, out_dtype=jnp.bfloat16):
    """Per-batch attention reading q/k/v straight from the batch-major (T, 3D) qkv."""
    T, D3 = qkv.shape
    D = D3 // 3
    n_batch = T // seq_len
    kernel = functools.partial(_attention_kernel, n_head=n_head, d_model=D,
                               sm_scale=1.0 / math.sqrt(D // n_head))
    return pl.pallas_call(
        kernel,
        out_shape=jax.ShapeDtypeStruct((T, D), out_dtype),
        grid=(n_batch,),
        in_specs=[
            pl.BlockSpec((seq_len, D3), lambda n: (n, 0)),       # one batch of qkv
            pl.BlockSpec((seq_len, seq_len), lambda n: (0, 0)),  # additive mask
        ],
        out_specs=pl.BlockSpec((seq_len, D), lambda n: (n, 0)),
        compiler_params=pltpu.CompilerParams(
            dimension_semantics=("parallel",),
            vmem_limit_bytes=_VMEM_LIMIT),
    )(qkv, mask)


def _drop_path_scales(rng, drop_prob, n):
    """Per-index scale = floor(keep_prob + U[0,1)) / keep_prob (torch drop_path semantics)."""
    if drop_prob == 0.0 or rng is None:
        return jnp.ones((n,), jnp.float32)
    keep = 1.0 - drop_prob
    u = jax.random.uniform(rng, (n,), jnp.float32)
    return jnp.floor(keep + u) / keep


# ------------------------------ module wrapper ------------------------------ #

class ResidualAttentionBlockPallas:
    """Pallas forward of CLIP's ResidualAttentionBlock (LN + MHA + QuickGELU MLP + DropPath)."""

    def __init__(self, d_model, n_head, attn_mask=None, dropout=0.0, *, key):
        assert d_model % n_head == 0
        self.d_model, self.n_head, self.dropout = d_model, n_head, float(dropout)
        self.attn_mask = attn_mask
        ks = jax.random.split(key, 8)
        s_d = d_model ** -0.5
        s_h = (4 * d_model) ** -0.5
        bf16, f32 = jnp.bfloat16, jnp.float32
        # Weights stored in bf16 (MXU-native); biases / LN params in f32.
        self.params = {
            "ln1_g": jnp.ones((d_model,), f32),
            "ln1_b": jnp.zeros((d_model,), f32),
            "w_in_t": (jax.random.normal(ks[0], (d_model, 3 * d_model), f32) * s_d).astype(bf16),
            "b_in": jax.random.normal(ks[1], (3 * d_model,), f32) * 0.02,
            "w_out_t": (jax.random.normal(ks[2], (d_model, d_model), f32) * s_d).astype(bf16),
            "b_out": jax.random.normal(ks[3], (d_model,), f32) * 0.02,
            "ln2_g": jnp.ones((d_model,), f32),
            "ln2_b": jnp.zeros((d_model,), f32),
            "w_fc_t": (jax.random.normal(ks[4], (d_model, 4 * d_model), f32) * s_d).astype(bf16),
            "b_fc": jax.random.normal(ks[5], (4 * d_model,), f32) * 0.02,
            "w_proj_t": (jax.random.normal(ks[6], (4 * d_model, d_model), f32) * s_h).astype(bf16),
            "b_proj": jax.random.normal(ks[7], (d_model,), f32) * 0.02,
        }

    def __call__(self, x, training=False, rng=None):
        L, N, D = x.shape                         # (seq, batch, d_model) — torch MHA layout
        H, T = self.n_head, L * N
        p = self.params

        # DropPath per dim-0 index of the (L, N, D) input (torch drop_path semantics).
        if training and self.dropout > 0.0:
            assert rng is not None, "training with dropout > 0 needs an rng key"
            r1, r2 = jax.random.split(rng)
            s1 = _drop_path_scales(r1, self.dropout, L)
            s2 = _drop_path_scales(r2, self.dropout, L)
        else:
            s1 = jnp.ones((L,), jnp.float32)
            s2 = jnp.ones((L,), jnp.float32)
        # Batch-major rows: row r = n*L + l  ->  scale[r] = s[l]
        scale1 = jnp.tile(s1, N).reshape(T, 1)
        scale2 = jnp.tile(s2, N).reshape(T, 1)

        mask = (self.attn_mask.astype(jnp.float32) if self.attn_mask is not None
                else jnp.zeros((L, L), jnp.float32))

        # Batch-major layout so attention rows are contiguous per batch (one transpose in/out).
        xb = x.transpose(1, 0, 2).reshape(T, D).astype(jnp.float32)

        # ---- attention branch: ln_1 fused into the QKV projection ----
        qkv = ln_linear(xb, p["ln1_g"], p["ln1_b"], p["w_in_t"], p["b_in"])     # (T, 3D) bf16
        attn = attention(qkv, mask, n_head=H, seq_len=L)                        # (T, D)  bf16
        # out_proj + DropPath scale + residual add in one kernel.
        # TODO(synk): nn.MultiheadAttention's attention-weight dropout (training mode
        # only) is not applied; inference semantics are exact.
        x_attn = linear_residual(attn, p["w_out_t"], p["b_out"], xb, scale1)    # (T, D) f32

        # ---- MLP branch: ln_2 + c_fc + QuickGELU fused; c_proj + DropPath + residual fused ----
        h = ln_linear(x_attn, p["ln2_g"], p["ln2_b"], p["w_fc_t"], p["b_fc"],
                      activation="quick_gelu")                                  # (T, 4D) bf16
        x_out = linear_residual(h, p["w_proj_t"], p["b_proj"], x_attn, scale2)  # (T, D)  f32

        return x_out.reshape(N, L, D).transpose(1, 0, 2).astype(x.dtype)


# ---------------------------- pure-JAX reference ---------------------------- #

def reference_block(params, x, attn_mask, n_head, s1, s2):
    """Mirrors the kernels' math (bf16 matmuls, f32 accumulate, f32 LN/softmax/residual)."""
    L, N, D = x.shape
    dh = D // n_head
    bf16, f32 = jnp.bfloat16, jnp.float32

    def ln(t, g, b, eps=1e-5):
        tf = t.astype(f32)
        mu = tf.mean(-1, keepdims=True)
        var = ((tf - mu) ** 2).mean(-1, keepdims=True)
        return (tf - mu) * jax.lax.rsqrt(var + eps) * g + b

    def mm(a, w):                      # bf16 x bf16 -> f32 accumulate, like the MXU kernels
        return jnp.einsum("...k,ke->...e", a.astype(bf16), w.astype(bf16),
                          preferred_element_type=f32)

    x = x.astype(f32)
    xin = ln(x, params["ln1_g"], params["ln1_b"])
    qkv = (mm(xin, params["w_in_t"]) + params["b_in"]).astype(bf16)
    q, k, v = jnp.split(qkv, 3, axis=-1)

    def heads(t):
        return t.reshape(L, N, n_head, dh).transpose(1, 2, 0, 3)    # (N, H, L, dh)

    qh, kh, vh = heads(q), heads(k), heads(v)
    s = jnp.einsum("nhld,nhmd->nhlm", qh, kh, preferred_element_type=f32) / math.sqrt(dh)
    if attn_mask is not None:
        s = s + attn_mask.astype(f32)
    pw = jax.nn.softmax(s, axis=-1)
    o = jnp.einsum("nhlm,nhmd->nhld", pw.astype(bf16), vh,
                   preferred_element_type=f32).astype(bf16)
    o = o.transpose(2, 0, 1, 3).reshape(L, N, D)
    attn_out = mm(o, params["w_out_t"]) + params["b_out"]
    x = x + s1.reshape(L, 1, 1) * attn_out

    xin2 = ln(x, params["ln2_g"], params["ln2_b"])
    hdn = mm(xin2, params["w_fc_t"]) + params["b_fc"]
    hdn = (hdn * jax.nn.sigmoid(1.702 * hdn)).astype(bf16)
    m = mm(hdn, params["w_proj_t"]) + params["b_proj"]
    return x + s2.reshape(L, 1, 1) * m


# ----------------------------------- demo ----------------------------------- #

if __name__ == "__main__":
    root = jax.random.PRNGKey(0)
    k_param, k_x, k_dp = jax.random.split(root, 3)

    L, N, D, H = 8, 2, 128, 4                    # seq=8, batch=2, d_model=128, heads=4
    x = jax.random.normal(k_x, (L, N, D), jnp.float32)

    # Causal additive attention mask (CLIP text-transformer style).
    rows = jnp.arange(L)
    causal = jnp.where(rows[None, :] > rows[:, None],
                       jnp.float32(float("-inf")), jnp.float32(0.0))

    block = ResidualAttentionBlockPallas(D, H, attn_mask=causal, dropout=0.25, key=k_param)

    # --- eval / inference forward (DropPath inactive) ---
    y = jax.block_until_ready(block(x, training=False))
    ones = jnp.ones((L,), jnp.float32)
    ref = reference_block(block.params, x, causal, H, ones, ones)
    assert y.shape == x.shape and y.dtype == x.dtype
    err = float(jnp.max(jnp.abs(y - ref)))
    assert jnp.allclose(y, ref, atol=2e-2, rtol=2e-2), f"eval forward mismatch, max err {err}"

    # --- training forward: DropPath scale fused into the residual-add kernels ---
    y_tr = jax.block_until_ready(block(x, training=True, rng=k_dp))
    r1, r2 = jax.random.split(k_dp)
    s1 = _drop_path_scales(r1, block.dropout, L)
    s2 = _drop_path_scales(r2, block.dropout, L)
    ref_tr = reference_block(block.params, x, causal, H, s1, s2)
    err_tr = float(jnp.max(jnp.abs(y_tr - ref_tr)))
    assert jnp.allclose(y_tr, ref_tr, atol=2e-2, rtol=2e-2), \
        f"training forward mismatch, max err {err_tr}"

    print("KERNEL_OK")
</pallas_src>

<mosaic_0001>
module attributes {stable_mosaic.version = 11 : i64} {
  func.func @_ln_linear_kernel(%arg0: i32, %arg1: i32, %arg2: memref<16x128xf32, #tpu.memory_space<vmem>>, %arg3: memref<1x128xf32, #tpu.memory_space<vmem>>, %arg4: memref<1x128xf32, #tpu.memory_space<vmem>>, %arg5: memref<128x384xbf16, #tpu.memory_space<vmem>>, %arg6: memref<1x384xf32, #tpu.memory_space<vmem>>, %arg7: memref<16x384xbf16, #tpu.memory_space<vmem>>, %arg8: memref<16x128xbf16, #tpu.memory_space<vmem>>) attributes {dimension_semantics = [#tpu.dimension_semantics<parallel>, #tpu.dimension_semantics<arbitrary>], iteration_bounds = array<i64: 1, 1>, scalar_prefetch = 0 : i64, scratch_operands = 1 : i64, tpu.core_type = #tpu.core_type<tc>, window_params = [{transform_indices = @transform_0, window_bounds = array<i64: 16, 128>}, {pipeline_mode = #tpu.pipeline_mode<synchronous>, transform_indices = @transform_1, window_bounds = array<i64: 1, 128>}, {pipeline_mode = #tpu.pipeline_mode<synchronous>, transform_indices = @transform_2, window_bounds = array<i64: 1, 128>}, {transform_indices = @transform_3, window_bounds = array<i64: 128, 384>}, {transform_indices = @transform_4, window_bounds = array<i64: 1, 384>}, {transform_indices = @transform_5, window_bounds = array<i64: 16, 384>}]} {
    %c0_i32 = arith.constant 0 : i32
    %0 = arith.cmpi eq, %arg1, %c0_i32 : i32
    %1 = arith.extui %0 : i1 to i32
    %c0_i32_0 = arith.constant 0 : i32
    %2 = arith.cmpi ne, %1, %c0_i32_0 : i32
    scf.if %2 {
      %c0_8 = arith.constant 0 : index
      %c0_9 = arith.constant 0 : index
      %11 = vector.load %arg2[%c0_8, %c0_9] : memref<16x128xf32, #tpu.memory_space<vmem>>, vector<16x128xf32>
      %cst_10 = arith.constant dense<0.000000e+00> : vector<16xf32>
      %12 = vector.multi_reduction <add>, %11, %cst_10 [1] : vector<16x128xf32> to vector<16xf32>
      %13 = vector.shape_cast %12 : vector<16xf32> to vector<16x1xf32>
      %cst_11 = arith.constant 1.280000e+02 : f32
      %14 = vector.broadcast %cst_11 : f32 to vector<16x1xf32>
      %15 = arith.divf %13, %14 : vector<16x1xf32>
      %16 = vector.broadcast %15 : vector<16x1xf32> to vector<16x128xf32>
      %17 = arith.subf %11, %16 : vector<16x128xf32>
      %18 = arith.mulf %17, %17 : vector<16x128xf32>
      %cst_12 = arith.constant dense<0.000000e+00> : vector<16xf32>
      %19 = vector.multi_reduction <add>, %18, %cst_12 [1] : vector<16x128xf32> to vector<16xf32>
      %20 = vector.shape_cast %19 : vector<16xf32> to vector<16x1xf32>
      %cst_13 = arith.constant 1.280000e+02 : f32
      %21 = vector.broadcast %cst_13 : f32 to vector<16x1xf32>
      %22 = arith.divf %20, %21 : vector<16x1xf32>
      %cst_14 = arith.constant 9.99999974E-6 : f32
      %23 = vector.broadcast %cst_14 : f32 to vector<16x1xf32>
      %24 = arith.addf %22, %23 : vector<16x1xf32>
      %25 = math.rsqrt %24 : vector<16x1xf32>
      %26 = vector.broadcast %25 : vector<16x1xf32> to vector<16x128xf32>
      %27 = arith.mulf %17, %26 : vector<16x128xf32>
      %c0_15 = arith.constant 0 : index
      %c0_16 = arith.constant 0 : index
      %28 = vector.load %arg3[%c0_15, %c0_16] : memref<1x128xf32, #tpu.memory_space<vmem>>, vector<1x128xf32>
      %29 = vector.broadcast %28 : vector<1x128xf32> to vector<16x128xf32>
      %30 = arith.mulf %27, %29 : vector<16x128xf32>
      %c0_17 = arith.constant 0 : index
      %c0_18 = arith.constant 0 : index
      %31 = vector.load %arg4[%c0_17, %c0_18] : memref<1x128xf32, #tpu.memory_space<vmem>>, vector<1x128xf32>
      %32 = vector.broadcast %31 : vector<1x128xf32> to vector<16x128xf32>
      %33 = arith.addf %30, %32 : vector<16x128xf32>
      %34 = arith.truncf %33 : vector<16x128xf32> to vector<16x128xbf16>
      %c0_19 = arith.constant 0 : index
      %c0_20 = arith.constant 0 : index
      %35 = vector.load %arg8[%c0_19, %c0_20] : memref<16x128xbf16, #tpu.memory_space<vmem>>, vector<16x128xbf16>
      tpu.vector_store %arg8[%c0_19, %c0_20], %34 {strides = array<i32>} : memref<16x128xbf16, #tpu.memory_space<vmem>>, vector<16x128xbf16>,
    } else {
    }
    %c0 = arith.constant 0 : index
    %c0_1 = arith.constant 0 : index
    %3 = vector.load %arg8[%c0, %c0_1] : memref<16x128xbf16, #tpu.memory_space<vmem>>, vector<16x128xbf16>
    %c0_2 = arith.constant 0 : index
    %c0_3 = arith.constant 0 : index
    %4 = vector.load %arg5[%c0_2, %c0_3] : memref<128x384xbf16, #tpu.memory_space<vmem>>, vector<128x384xbf16>
    %cst = arith.constant dense<0.000000e+00> : vector<16x384xf32>
    %5 = tpu.matmul %3, %4, %cst {dimension_numbers = #tpu.dot_dimension_numbers<[1], [0], [0], [1], [0, 0, 1, 1], [], []>} : vector<16x128xbf16>, vector<128x384xbf16>, vector<16x384xf32> -> vector<16x384xf32>
    %c0_4 = arith.constant 0 : index
    %c0_5 = arith.constant 0 : index
    %6 = vector.load %arg6[%c0_4, %c0_5] : memref<1x384xf32, #tpu.memory_space<vmem>>, vector<1x384xf32>
    %7 = vector.broadcast %6 : vector<1x384xf32> to vector<16x384xf32>
    %8 = arith.addf %5, %7 : vector<16x384xf32>
    %9 = arith.truncf %8 : vector<16x384xf32> to vector<16x384xbf16>
    %c0_6 = arith.constant 0 : index
    %c0_7 = arith.constant 0 : index
    %10 = vector.load %arg7[%c0_6, %c0_7] : memref<16x384xbf16, #tpu.memory_space<vmem>>, vector<16x384xbf16>
    tpu.vector_store %arg7[%c0_6, %c0_7], %9 {strides = array<i32>} : memref<16x384xbf16, #tpu.memory_space<vmem>>, vector<16x384xbf16>,
    return
  }
  func.func @transform_0(%arg0: i32, %arg1: i32) -> (i32, i32) {
    %c0_i32 = arith.constant 0 : i32
    %c0_i32_0 = arith.constant 0 : i32
    return %arg0, %c0_i32 : i32, i32
  }
  func.func @transform_1(%arg0: i32, %arg1: i32) -> (i32, i32) {
    %c0_i32 = arith.constant 0 : i32
    %c0_i32_0 = arith.constant 0 : i32
    %c0_i32_1 = arith.constant 0 : i32
    return %c0_i32, %c0_i32_0 : i32, i32
  }
  func.func @transform_2(%arg0: i32, %arg1: i32) -> (i32, i32) {
    %c0_i32 = arith.constant 0 : i32
    %c0_i32_0 = arith.constant 0 : i32
    %c0_i32_1 = arith.constant 0 : i32
    return %c0_i32, %c0_i32_0 : i32, i32
  }
  func.func @transform_3(%arg0: i32, %arg1: i32) -> (i32, i32) {
    %c0_i32 = arith.constant 0 : i32
    %c0_i32_0 = arith.constant 0 : i32
    return %c0_i32, %arg1 : i32, i32
  }
  func.func @transform_4(%arg0: i32, %arg1: i32) -> (i32, i32) {
    %c0_i32 = arith.constant 0 : i32
    %c0_i32_0 = arith.constant 0 : i32
    return %c0_i32, %arg1 : i32, i32
  }
  func.func @transform_5(%arg0: i32, %arg1: i32) -> (i32, i32) {
    %c0_i32 = arith.constant 0 : i32
    return %arg0, %arg1 : i32, i32
  }
}

</mosaic_0001>

<llo_original>
// kernel: tpu_custom_call.1
$region0: #{tpu_custom_call.1}
  #allocation0 [shape = 'u32[]', space=smem, size = 0x4, offset = 0x4, fixed_abs, tag = 'smem constant byte address 0x4 - core index']
  #allocation1 [shape = 'u32[144,128]{1,0:T(1,128)}', space=vmem, size = 0x12000, scoped, tag = 'internal scratch']
  #allocation2 [shape = 'bf16[16,128]{1,0:T(16,128)(2,1)}', space=vmem, size = 0x1000, scoped, tag = 'scratch operand']
  %s0 = inlined_call_operand.hbm [shape: f32[16,128], index: 0, kind: input, shape index: {}]
  %s1 = inlined_call_operand.vmem [shape: f32[1,128], index: 1, kind: input, shape index: {}]
  %s2 = inlined_call_operand.vmem [shape: f32[1,128], index: 2, kind: input, shape index: {}]
  %s3 = inlined_call_operand.hbm [shape: bf16[128,384], index: 3, kind: input, shape index: {}]
  %s4 = inlined_call_operand.vmem [shape: f32[1,384], index: 4, kind: input, shape index: {}]
  %s5 = inlined_call_operand.hbm [shape: bf16[16,384], index: 5, kind: output, shape index: {}]
  %s6 = sld [smem:[#allocation0]]
  $region42: #{tpu_custom_call.1} parent=0
    _
  %s8 = ssub.s32 1, %s6
  %s9 = scalar_select 0, %s8, %s6
  $region1: #{tpu_custom_call.1} parent=0
    #allocation3 [shape = 'u8[8192]{0}', space=vmem, size = 0x2000, scoped, tag = 'input window, operand 0, single buffered']
    #allocation4 [shape = 's32[1]{0}', space=sflag, size = 0x4, scoped, tag = 'scoped memory for tpu_custom_call.1']
    #allocation5 [shape = 's32[1]{0}', space=sflag, size = 0x4, scoped, tag = 'scoped memory for tpu_custom_call.1']
    #allocation6 [shape = 'u8[98304]{0}', space=vmem, size = 0x18000, scoped, tag = 'input window, operand 3, single buffered']
    #allocation7 [shape = 's32[1]{0}', space=sflag, size = 0x4, scoped, tag = 'scoped memory for tpu_custom_call.1']
    #allocation8 [shape = 'u8[12288]{0}', space=vmem, size = 0x3000, scoped, tag = 'output window, operand 0, single buffered']
    %10 = vsyncpa [#allocation4], 0
    %11 = vsyncpa [#allocation7], 0
    %12 = vsyncpa [#allocation5], 0
    // Predicated region
    $region2: #{tpu_custom_call.1} parent=1 // pred_check
      _
    $region3: #{tpu_custom_call.1} parent=1 // pred_check_branch
      %14 = sbr.rel (0) target = $region5
    $region4: #{tpu_custom_call.1} parent=1 // pred_region
      %s16 = ssub.s32 256, 256
      %17 = vsyncadd [#allocation4], %s16
      %s18 = sshll.u32 [#allocation3], 4
      %s19 = int_to_ptr.vmem [resolvable:$true] %s18
      %24 = dma.hbm_to_vmem [thread:$0]  %s0, 256, %s19, [#allocation4], 128, 128, 8
    $region5: #{tpu_custom_call.1} parent=1 // pred_fallthru
      _
    // Predicated region
    $region6: #{tpu_custom_call.1} parent=1 // pred_check
      _
    $region7: #{tpu_custom_call.1} parent=1 // pred_check_branch
      %26 = sbr.rel (0) target = $region9
    $region8: #{tpu_custom_call.1} parent=1 // pred_region
      _
    $region9: #{tpu_custom_call.1} parent=1 // pred_fallthru
      _
    // Predicated region
    $region10: #{tpu_custom_call.1} parent=1 // pred_check
      _
    $region11: #{tpu_custom_call.1} parent=1 // pred_check_branch
      %28 = sbr.rel (0) target = $region13
    $region12: #{tpu_custom_call.1} parent=1 // pred_region
      _
    $region13: #{tpu_custom_call.1} parent=1 // pred_fallthru
      _
    // Predicated region
    $region14: #{tpu_custom_call.1} parent=1 // pred_check
      _
    $region15: #{tpu_custom_call.1} parent=1 // pred_check_branch
      %30 = sbr.rel (0) target = $region17
    $region16: #{tpu_custom_call.1} parent=1 // pred_region
      %s32 = ssub.s32 3072, 3072
      %33 = vsyncadd [#allocation7], %s32
      %s34 = sshll.u32 [#allocation6], 4
      %s35 = int_to_ptr.vmem [resolvable:$true] %s34
      %40 = dma.hbm_to_vmem [thread:$0]  %s3, 3072, %s35, [#allocation7], 192, 192, 12
    $region17: #{tpu_custom_call.1} parent=1 // pred_fallthru
      _
    // Predicated region
    $region18: #{tpu_custom_call.1} parent=1 // pred_check
      _
    $region19: #{tpu_custom_call.1} parent=1 // pred_check_branch
      %42 = sbr.rel (0) target = $region21
    $region20: #{tpu_custom_call.1} parent=1 // pred_region
      _
    $region21: #{tpu_custom_call.1} parent=1 // pred_fallthru
      _
    // Predicated region
    $region22: #{tpu_custom_call.1} parent=1 // pred_check
      _
    $region23: #{tpu_custom_call.1} parent=1 // pred_check_branch
      %44 = sbr.rel (0) target = $region25
    $region24: #{tpu_custom_call.1} parent=1 // pred_region
      %45 = dma.done [#allocation4], 256
    $region25: #{tpu_custom_call.1} parent=1 // pred_fallthru
      _
    // Predicated region
    $region26: #{tpu_custom_call.1} parent=1 // pred_check
      _
    $region27: #{tpu_custom_call.1} parent=1 // pred_check_branch
      %47 = sbr.rel (0) target = $region29
    $region28: #{tpu_custom_call.1} parent=1 // pred_region
      %48 = dma.done [#allocation7], 3072
    $region29: #{tpu_custom_call.1} parent=1 // pred_fallthru
      _
    %p50 = scmp.eq.s32.totalorder 0, 0
    // Predicated region
    $region30: #{tpu_custom_call.1} parent=1 // pred_check
      %p51 = pneg %p50
    $region31: #{tpu_custom_call.1} parent=1 // pred_check_branch
      %53 = sbr.rel (%p51) target = $region33
    $region32: #{tpu_custom_call.1} parent=1 // pred_region
      %v54 = vld [vmem:[#allocation3] sm:$0xff]
      %v55 = vld [vmem:[#allocation3 + $0x8] sm:$0xff]
      %56 = vadd.xlane.f32.xlu0 %v54
      %v57 = vpop.xlane.xlu0 %56
      %58 = vadd.xlane.f32.xlu0 %v55
      %v59 = vpop.xlane.xlu0 %58
      %v60 = vrcp.pop 128.0
      %v61 = vmul.f32 %v57, %v60
      %v62 = vmul.f32 %v59, %v60
      %v63 = vsub.f32 %v54, %v61
      %v64 = vsub.f32 %v55, %v62
      %v65 = vmul.f32 %v63, %v63
      %v66 = vmul.f32 %v64, %v64
      %67 = vadd.xlane.f32.xlu0 %v65
      %v68 = vpop.xlane.xlu0 %67
      %69 = vadd.xlane.f32.xlu0 %v66
      %v70 = vpop.xlane.xlu0 %69
      %v71 = vmul.f32 %v68, %v60
      %v72 = vmul.f32 %v70, %v60
      %v73 = vadd.f32 %v71, 1e-05
      %v74 = vadd.f32 %v72, 1e-05
      %v75 = vrsqrt.pop %v73
      %v76 = vrsqrt.pop %v74
      %v77 = vmul.f32 %v63, %v75
      %v78 = vmul.f32 %v64, %v76
      %v79 = vld [vmem:[%s1] sm:$0x1]
      %v81 = vlaneseq
      %v82 = vshrl.u32 %v81, 7
      %v83 = vsub.s32 0, %v82
      %v84 = vrot.slane %v79, %v83
      %v86 = vmul.f32 %v77, %v84
      %v87 = vmul.f32 %v78, %v84
      %v88 = vld [vmem:[%s2] sm:$0x1]
      %v90 = vlaneseq
      %v91 = vshrl.u32 %v90, 7
      %v92 = vsub.s32 0, %v91
      %v93 = vrot.slane %v88, %v92
      %v95 = vadd.f32 %v86, %v93
      %v96 = vadd.f32 %v87, %v93
      %v97 = vpack.c.bf16 %v96, %v95
      %98 = vst [vmem:[#allocation2] sm:$0xff] %v97
    $region33: #{tpu_custom_call.1} parent=1 // pred_fallthru
      _
    %v99 = vld [vmem:[#allocation2] sm:$0xff]
    %v100 = vld [vmem:[#allocation6] sm:$0xff]
    %v101 = vld [vmem:[#allocation6 + $0x8] sm:$0xf]
    %v102 = vld [vmem:[#allocation6 + $0xc] sm:$0xff]
    %v103 = vld [vmem:[#allocation6 + $0x14] sm:$0xf]
    %v104 = vld [vmem:[#allocation6 + $0x18] sm:$0xff]
    %v105 = vld [vmem:[#allocation6 + $0x20] sm:$0xf]
    %v106 = vld [vmem:[#allocation6 + $0x24] sm:$0xff]
    %v107 = vld [vmem:[#allocation6 + $0x2c] sm:$0xf]
    %v108 = vld [vmem:[#allocation6 + $0x30] sm:$0xff]
    %v109 = vld [vmem:[#allocation6 + $0x38] sm:$0xf]
    %v110 = vld [vmem:[#allocation6 + $0x3c] sm:$0xff]
    %v111 = vld [vmem:[#allocation6 + $0x44] sm:$0xf]
    %v112 = vld [vmem:[#allocation6 + $0x48] sm:$0xff]
    %v113 = vld [vmem:[#allocation6 + $0x50] sm:$0xf]
    %v114 = vld [vmem:[#allocation6 + $0x54] sm:$0xff]
    %v115 = vld [vmem:[#allocation6 + $0x5c] sm:$0xf]
    %v116 = vld [vmem:[#allocation6 + $0x60] sm:$0xff]
    %v117 = vld [vmem:[#allocation6 + $0x68] sm:$0xf]
    %v118 = vld [vmem:[#allocation6 + $0x6c] sm:$0xff]
    %v119 = vld [vmem:[#allocation6 + $0x74] sm:$0xf]
    %v120 = vld [vmem:[#allocation6 + $0x78] sm:$0xff]
    %v121 = vld [vmem:[#allocation6 + $0x80] sm:$0xf]
    %v122 = vld [vmem:[#allocation6 + $0x84] sm:$0xff]
    %v123 = vld [vmem:[#allocation6 + $0x8c] sm:$0xf]
    %v124 = vld [vmem:[#allocation6 + $0x90] sm:$0xff]
    %v125 = vld [vmem:[#allocation6 + $0x98] sm:$0xf]
    %v126 = vld [vmem:[#allocation6 + $0x9c] sm:$0xff]
    %v127 = vld [vmem:[#allocation6 + $0xa4] sm:$0xf]
    %v128 = vld [vmem:[#allocation6 + $0xa8] sm:$0xff]
    %v129 = vld [vmem:[#allocation6 + $0xb0] sm:$0xf]
    %v130 = vld [vmem:[#allocation6 + $0xb4] sm:$0xff]
    %v131 = vld [vmem:[#allocation6 + $0xbc] sm:$0xf]
    %v132 = vld [vmem:[%s4] sm:$0x7]
    %v134 = vlaneseq
    %v135 = vshrl.u32 %v134, 7
    %v136 = vsub.s32 0, %v135
    %v137 = vrot.slane %v132, %v136
    %v138 = vlaneseq
    %v139 = vshrl.u32 %v138, 7
    %v140 = vsub.s32 1, %v139
    %v141 = vrot.slane %v132, %v140
    %v142 = vlaneseq
    %v143 = vshrl.u32 %v142, 7
    %v144 = vsub.s32 2, %v143
    %v145 = vrot.slane %v132, %v144
    %v181 = vunpack.c.l.b16 %v100
    %v182 = vunpack.c.h.b16 %v100
    %v183 = vunpack.c.l.b16 %v101
    %v184 = vunpack.c.l.b16 %v102
    %v185 = vunpack.c.h.b16 %v102
    %v186 = vunpack.c.l.b16 %v103
    %v187 = vunpack.c.l.b16 %v104
    %v188 = vunpack.c.h.b16 %v104
    %v189 = vunpack.c.l.b16 %v105
    %v190 = vunpack.c.l.b16 %v106
    %v191 = vunpack.c.h.b16 %v106
    %v192 = vunpack.c.l.b16 %v107
    %v193 = vunpack.c.l.b16 %v108
    %v194 = vunpack.c.h.b16 %v108
    %v195 = vunpack.c.l.b16 %v109
    %v196 = vunpack.c.l.b16 %v110
    %v197 = vunpack.c.h.b16 %v110
    %v198 = vunpack.c.l.b16 %v111
    %v199 = vunpack.c.l.b16 %v112
    %v200 = vunpack.c.h.b16 %v112
    %v201 = vunpack.c.l.b16 %v113
    %v202 = vunpack.c.l.b16 %v114
    %v203 = vunpack.c.h.b16 %v114
    %v204 = vunpack.c.l.b16 %v115
    %v205 = vunpack.c.l.b16 %v116
    %v206 = vunpack.c.h.b16 %v116
    %v207 = vunpack.c.l.b16 %v117
    %v208 = vunpack.c.l.b16 %v118
    %v209 = vunpack.c.h.b16 %v118
    %v210 = vunpack.c.l.b16 %v119
    %v211 = vunpack.c.l.b16 %v120
    %v212 = vunpack.c.h.b16 %v120
    %v213 = vunpack.c.l.b16 %v121
    %v214 = vunpack.c.l.b16 %v122
    %v215 = vunpack.c.h.b16 %v122
    %v216 = vunpack.c.l.b16 %v123
    %v217 = vunpack.c.l.b16 %v124
    %v218 = vunpack.c.h.b16 %v124
    %v219 = vunpack.c.l.b16 %v125
    %v220 = vunpack.c.l.b16 %v126
    %v221 = vunpack.c.h.b16 %v126
    %v222 = vunpack.c.l.b16 %v127
    %v223 = vunpack.c.l.b16 %v128
    %v224 = vunpack.c.h.b16 %v128
    %v225 = vunpack.c.l.b16 %v129
    %v226 = vunpack.c.l.b16 %v130
    %v227 = vunpack.c.h.b16 %v130
    %v228 = vunpack.c.l.b16 %v131
    %v229 = vpack.c.b16 %v184, %v181
    %v230 = vpack.c.b16 %v185, %v182
    %v231 = vpack.c.b16 %v186, %v183
    %v232 = vpack.c.b16 %v190, %v187
    %v233 = vpack.c.b16 %v191, %v188
    %v234 = vpack.c.b16 %v192, %v189
    %v235 = vpack.c.b16 %v196, %v193
    %v236 = vpack.c.b16 %v197, %v194
    %v237 = vpack.c.b16 %v198, %v195
    %v238 = vpack.c.b16 %v202, %v199
    %v239 = vpack.c.b16 %v203, %v200
    %v240 = vpack.c.b16 %v204, %v201
    %v241 = vpack.c.b16 %v208, %v205
    %v242 = vpack.c.b16 %v209, %v206
    %v243 = vpack.c.b16 %v210, %v207
    %v244 = vpack.c.b16 %v214, %v211
    %v245 = vpack.c.b16 %v215, %v212
    %v246 = vpack.c.b16 %v216, %v213
    %v247 = vpack.c.b16 %v220, %v217
    %v248 = vpack.c.b16 %v221, %v218
    %v249 = vpack.c.b16 %v222, %v219
    %v250 = vpack.c.b16 %v226, %v223
    %v251 = vpack.c.b16 %v227, %v224
    %v252 = vpack.c.b16 %v228, %v225
    %277 = vmatprep.subr.bf16.mxu0 %v230
    %278 = vmatpush1.bf16.msra.mxu0 %v229
    %279 = vmatprep.subr.bf16.mxu0 %v233
    %280 = vmatpush1.bf16.msra.mxu0 %v232
    %281 = vmatprep.subr.bf16.mxu0 %v236
    %282 = vmatpush1.bf16.msra.mxu0 %v235
    %283 = vmatprep.subr.bf16.mxu0 %v239
    %284 = vmatpush1.bf16.msra.mxu0 %v238
    %285 = vmatprep.subr.bf16.mxu0 %v242
    %286 = vmatpush1.bf16.msra.mxu0 %v241
    %287 = vmatprep.subr.bf16.mxu0 %v245
    %288 = vmatpush1.bf16.msra.mxu0 %v244
    %289 = vmatprep.subr.bf16.mxu0 %v248
    %290 = vmatpush1.bf16.msra.mxu0 %v247
    %291 = vmatprep.subr.bf16.mxu0 %v251
    %292 = vmatpush1.bf16.msra.mxu0 %v250
    %293 = vmatprep.subr.bf16.mxu0 0
    %294 = vmatpush1.bf16.msra.mxu0 0
    %295 = vmatprep.subr.bf16.mxu0 0
    %296 = vmatpush1.bf16.msra.mxu0 0
    %297 = vmatprep.subr.bf16.mxu0 0
    %298 = vmatpush1.bf16.msra.mxu0 0
    %299 = vmatprep.subr.bf16.mxu0 0
    %300 = vmatpush1.bf16.msra.mxu0 0
    %301 = vmatprep.subr.bf16.mxu0 0
    %302 = vmatpush1.bf16.msra.mxu0 0
    %303 = vmatprep.subr.bf16.mxu0 0
    %304 = vmatpush1.bf16.msra.mxu0 0
    %305 = vmatprep.subr.bf16.mxu0 0
    %306 = vmatpush1.bf16.msra.mxu0 0
    %307 = vmatprep.subr.bf16.mxu0 0
    %308 = vmatpush1.bf16.msra.mxu0 0
    %309 = vmatprep.mubr.bf16.mxu0 0
    %310 = vmatmul.mubr.bf16.gmra.mrb[0].mxu0 %v99
    %v311 = vpop.f32.mrb[0].mxu0
    %v312 = vadd.f32 %v137, %v311
    %v313 = vpop.f32.mrb[0].mxu0
    %v314 = vadd.f32 %v141, %v313
    %v315 = vpop.f32.mrb[0].mxu0
    %v316 = vadd.f32 %v137, %v315
    %v317 = vpop.f32.mrb[0].mxu0
    %v318 = vadd.f32 %v141, %v317
    %319 = vdwg.mxu0
    %320 = vmatprep.subr.bf16.mxu0 0
    %321 = vmatpush1.bf16.msra.mxu0 %v231
    %322 = vmatprep.subr.bf16.mxu0 0
    %323 = vmatpush1.bf16.msra.mxu0 %v234
    %324 = vmatprep.subr.bf16.mxu0 0
    %325 = vmatpush1.bf16.msra.mxu0 %v237
    %326 = vmatprep.subr.bf16.mxu0 0
    %327 = vmatpush1.bf16.msra.mxu0 %v240
    %328 = vmatprep.subr.bf16.mxu0 0
    %329 = vmatpush1.bf16.msra.mxu0 %v243
    %330 = vmatprep.subr.bf16.mxu0 0
    %331 = vmatpush1.bf16.msra.mxu0 %v246
    %332 = vmatprep.subr.bf16.mxu0 0
    %333 = vmatpush1.bf16.msra.mxu0 %v249
    %334 = vmatprep.subr.bf16.mxu0 0
    %335 = vmatpush1.bf16.msra.mxu0 %v252
    %336 = vmatprep.subr.bf16.mxu0 0
    %337 = vmatpush1.bf16.msra.mxu0 0
    %338 = vmatprep.subr.bf16.mxu0 0
    %339 = vmatpush1.bf16.msra.mxu0 0
    %340 = vmatprep.subr.bf16.mxu0 0
    %341 = vmatpush1.bf16.msra.mxu0 0
    %342 = vmatprep.subr.bf16.mxu0 0
    %343 = vmatpush1.bf16.msra.mxu0 0
    %344 = vmatprep.subr.bf16.mxu0 0
    %345 = vmatpush1.bf16.msra.mxu0 0
    %346 = vmatprep.subr.bf16.mxu0 0
    %347 = vmatpush1.bf16.msra.mxu0 0
    %348 = vmatprep.subr.bf16.mxu0 0
    %349 = vmatpush1.bf16.msra.mxu0 0
    %350 = vmatprep.subr.bf16.mxu0 0
    %351 = vmatpush1.bf16.msra.mxu0 0
    %352 = vmatprep.mubr.bf16.mxu0 0
    %353 = vmatmul.mubr.bf16.gmra.mrb[0].mxu0 %v99
    %v354 = vpop.f32.mrb[0].mxu0
    %v355 = vadd.f32 %v145, %v354
    %v356 = vpop.f32.mrb[0].mxu0
    %v357 = vpop.f32.mrb[0].mxu0
    %v358 = vadd.f32 %v145, %v357
    %v359 = vpop.f32.mrb[0].mxu0
    %360 = vdwg.mxu0
    %v361 = vpack.c.bf16 %v316, %v312
    %v362 = vpack.c.bf16 %v318, %v314
    %v363 = vpack.c.bf16 %v358, %v355
    %v367 = vunpack.c.l.b16 %v361
    %v368 = vunpack.c.l.b16 %v362
    %v369 = vunpack.c.l.b16 %v363
    %v370 = vunpack.c.h.b16 %v361
    %v371 = vunpack.c.h.b16 %v362
    %v372 = vunpack.c.h.b16 %v363
    %v373 = vpack.c.b16 %v368, %v367
    %v374 = vpack.c.b16 %v369, %v369
    %v375 = vpack.c.b16 %v371, %v370
    %v376 = vpack.c.b16 %v372, %v372
    %381 = vst [vmem:[#allocation8] sm:$0xff] %v373
    %382 = vst [vmem:[#allocation8 + $0x8] sm:$0xf] %v374
    %383 = vst [vmem:[#allocation8 + $0xc] sm:$0xff] %v375
    %384 = vst [vmem:[#allocation8 + $0x14] sm:$0xf] %v376
    // Predicated region
    $region34: #{tpu_custom_call.1} parent=1 // pred_check
      _
    $region35: #{tpu_custom_call.1} parent=1 // pred_check_branch
      %386 = sbr.rel (0) target = $region37
    $region36: #{tpu_custom_call.1} parent=1 // pred_region
      %s388 = ssub.s32 384, 384
      %389 = vsyncadd [#allocation5], %s388
      %s390 = sshll.u32 [#allocation8], 4
      %s391 = int_to_ptr.vmem [resolvable:$true] %s390
      %396 = dma.vmem_to_hbm [thread:$0]  %s391, 384, %s5, [#allocation5], 192, 192, 12
    $region37: #{tpu_custom_call.1} parent=1 // pred_fallthru
      _
    // Predicated region
    $region38: #{tpu_custom_call.1} parent=1 // pred_check
      _
    $region39: #{tpu_custom_call.1} parent=1 // pred_check_branch
      %398 = sbr.rel (0) target = $region41
    $region40: #{tpu_custom_call.1} parent=1 // pred_region
      %399 = dma.done [#allocation5], 384
    $region41: #{tpu_custom_call.1} parent=1 // pred_fallthru
      _
    %400 = vsyncpa [#allocation4], 1
    %401 = vsyncpa [#allocation7], 1
    %402 = vsyncpa [#allocation5], 1

</llo_original>
